<compile_context>
chip_gen: v7x
topology: tpu7x:2x2x1
jax: 0.10.0
libtpu: 0.0.40
codegen_flags: <defaults>
</compile_context>

<pallas_src>
import functools
import math

import jax
import jax.numpy as jnp
from jax.experimental import pallas as pl
from jax.experimental.pallas import tpu as pltpu


VMEM_LIMIT_BYTES = 48 * 1024 * 1024   # > 32 MiB scoped default, < v7x 64 MiB physical


def _is_legacy_tpu():
    """True for v2-v5 class chips (128-wide MXU, no bf16 EUP); False for v6e/v7x/unknown."""
    try:
        kind = jax.devices()[0].device_kind.lower()
    except Exception:
        return False
    return any(tag in kind for tag in ("v2", "v3", "v4", "v5"))


# ------------------------- kernel 1: QKV projection ---------------------------

def qkv_proj_kernel(x_ref, wq_ref, wk_ref, wv_ref, q_ref, k_ref, v_ref):
    """x (1, ts, D) @ Wq/Wk/Wv (D, inner) -> q, k, v (1, ts, inner), written directly."""
    x = x_ref[0]                                                    # (ts, D) bf16
    q_ref[0] = jnp.dot(x, wq_ref[...],
                       preferred_element_type=jnp.float32).astype(q_ref.dtype)
    k_ref[0] = jnp.dot(x, wk_ref[...],
                       preferred_element_type=jnp.float32).astype(k_ref.dtype)
    v_ref[0] = jnp.dot(x, wv_ref[...],
                       preferred_element_type=jnp.float32).astype(v_ref.dtype)


# --------------- kernel 2: flash attention + bias + O projection --------------

def flash_attn_o_kernel(q_ref, k_ref, v_ref, bias_ref, wo_ref, out_ref,
                        m_ref, l_ref, acc_ref, *, n_heads, d_kv, exp_dtype):
    ik = pl.program_id(2)
    n_kv = pl.num_programs(2)
    tk = k_ref.shape[1]

    @pl.when(ik == 0)
    def _init():
        m_ref[...] = jnp.full(m_ref.shape, -jnp.inf, dtype=m_ref.dtype)
        l_ref[...] = jnp.zeros(l_ref.shape, dtype=l_ref.dtype)
        acc_ref[...] = jnp.zeros(acc_ref.shape, dtype=acc_ref.dtype)

    # Hoisted constants (row-sum via MXU instead of an XLU reduction).
    ones_col = jnp.ones((tk, 1), dtype=exp_dtype)

    # Single slab load of the online-softmax state (no per-head width-1 RMWs).
    m_prev_all = m_ref[...]                                         # (tq, H) f32
    l_prev_all = l_ref[...]                                         # (tq, H) f32

    # Two heads per group -> 128-lane aligned accumulator RMW at d_kv=64.
    hpg = 2 if n_heads % 2 == 0 else 1
    n_groups = n_heads // hpg

    m_cols, l_cols = [], []
    for g in range(n_groups):
        gsl = slice(g * hpg * d_kv, (g + 1) * hpg * d_kv)
        acc_prev = acc_ref[:, gsl]                                  # aligned group read
        new_cols = []
        for j in range(hpg):
            h = g * hpg + j
            hsl = slice(h * d_kv, (h + 1) * d_kv)
            q_h = q_ref[0, :, hsl]                                  # (tq, d_kv) bf16
            k_h = k_ref[0, :, hsl]                                  # (tk, d_kv) bf16
            v_h = v_ref[0, :, hsl]                                  # (tk, d_kv) bf16

            # scores = q_h @ k_h^T (no 1/sqrt(d) scaling in T5), f32 accumulation.
            s = jax.lax.dot_general(q_h, k_h, (((1,), (1,)), ((), ())),
                                    preferred_element_type=jnp.float32)   # (tq, tk)
            s = s + bias_ref[0, h].astype(jnp.float32)

            m_prev = m_prev_all[:, h:h + 1]                         # (tq, 1) f32
            l_prev = l_prev_all[:, h:h + 1]
            m_new = jnp.maximum(m_prev, jnp.max(s, axis=-1, keepdims=True))
            alpha = jnp.exp(m_prev - m_new)                         # (tq, 1) f32 (cheap)
            p = jnp.exp((s - m_new).astype(exp_dtype))              # big exp on EUP

            # row-sum of p folded onto the MXU (keeps the XLU for the row-max only)
            l_delta = jnp.dot(p, ones_col, preferred_element_type=jnp.float32)
            m_cols.append(m_new)
            l_cols.append(alpha * l_prev + l_delta)

            pv = jnp.dot(p.astype(v_h.dtype), v_h,
                         preferred_element_type=jnp.float32)        # (tq, d_kv) f32
            new_cols.append(alpha * acc_prev[:, j * d_kv:(j + 1) * d_kv] + pv)

        acc_ref[:, gsl] = (jnp.concatenate(new_cols, axis=1)
                           if hpg > 1 else new_cols[0])             # one aligned store

    # Single slab store of the updated state.
    m_ref[...] = jnp.concatenate(m_cols, axis=1) if n_heads > 1 else m_cols[0]
    l_ref[...] = jnp.concatenate(l_cols, axis=1) if n_heads > 1 else l_cols[0]

    @pl.when(ik == n_kv - 1)
    def _finalize():
        # Guard against fully-masked rows (l == 0) before the approx reciprocal.
        l_all = jnp.maximum(l_ref[...], 1e-30)
        groups = []
        for g in range(n_groups):
            gsl = slice(g * hpg * d_kv, (g + 1) * hpg * d_kv)
            acc_g = acc_ref[:, gsl]
            cols = []
            for j in range(hpg):
                h = g * hpg + j
                inv_l = pl.reciprocal(l_all[:, h:h + 1], approx=True)     # EUP slot
                cols.append(acc_g[:, j * d_kv:(j + 1) * d_kv] * inv_l)
            groups.append(jnp.concatenate(cols, axis=1) if hpg > 1 else cols[0])
        ctx = (jnp.concatenate(groups, axis=1)
               if n_groups > 1 else groups[0]).astype(wo_ref.dtype)        # (tq, inner)
        out = jnp.dot(ctx, wo_ref[...], preferred_element_type=jnp.float32)
        out_ref[0] = out.astype(out_ref.dtype)                             # lane-dense store


# ------------------------- relative position bias (glue) ----------------------

def _relative_position_bucket(relative_position, bidirectional=True,
                              num_buckets=32, max_distance=128):
    ret = jnp.zeros_like(relative_position)
    n = -relative_position
    if bidirectional:
        num_buckets //= 2
        ret = ret + (n < 0).astype(jnp.int32) * num_buckets
        n = jnp.abs(n)
    else:
        n = jnp.maximum(n, 0)
    max_exact = num_buckets // 2
    is_small = n < max_exact
    val_if_large = max_exact + (
        jnp.log(jnp.maximum(n, 1).astype(jnp.float32) / max_exact)
        / math.log(max_distance / max_exact) * (num_buckets - max_exact)
    ).astype(jnp.int32)
    val_if_large = jnp.minimum(val_if_large, num_buckets - 1)
    return ret + jnp.where(is_small, n, val_if_large)


def _bucketed_bias(weight, relative_position, num_buckets, bidirectional):
    rp_bucket = _relative_position_bucket(relative_position,
                                          bidirectional=bidirectional,
                                          num_buckets=num_buckets)
    return weight[rp_bucket]                               # (..., H)


def compute_position_bias(weight, qlen, klen, num_buckets, bidirectional=True):
    """Full (H, qlen, klen) bias (returned to the caller, matching the module)."""
    ctx = jnp.arange(qlen, dtype=jnp.int32)[:, None]
    mem = jnp.arange(klen, dtype=jnp.int32)[None, :]
    values = _bucketed_bias(weight, mem - ctx, num_buckets, bidirectional)   # (q,k,H)
    return jnp.transpose(values, (2, 0, 1))


def compute_position_bias_diag_tiles(weight, S, tq, tk, num_buckets,
                                     bidirectional=True):
    """Deduplicated bias tiles: bias only depends on (j - i), so a (tq, tk) tile only
    depends on the tile diagonal d = ik - (tq//tk)*iq.  Returns (n_diag, H, tq, tk)."""
    m = tq // tk
    n_k = S // tk
    n_diag = 2 * n_k - m
    offs = n_k - m
    diag = jnp.arange(n_diag, dtype=jnp.int32) - offs                       # (n_diag,)
    mem = diag[:, None, None] * tk + jnp.arange(tk, dtype=jnp.int32)[None, None, :]
    ctx = jnp.arange(tq, dtype=jnp.int32)[None, :, None]
    values = _bucketed_bias(weight, mem - ctx, num_buckets, bidirectional)   # (n_diag,tq,tk,H)
    return jnp.transpose(values, (0, 3, 1, 2)), offs, m


# --------------------------------- wrapper -------------------------------------

def _pick_tile(s, target):
    if s >= target and s % target == 0:
        return target
    if s >= 128 and s % 128 == 0:
        return 128
    return s


def t5_attention(hidden_states, params, *, n_heads, d_kv, num_buckets,
                 is_decoder=False, mask=None, compute_dtype=jnp.bfloat16,
                 q_tile=None, kv_tile=None, exp_dtype=None):
    """T5Attention forward (self-attention, no cache, eval mode).

    Weights are stored pre-transposed (y = x @ W).  Returns
    (context, present_key_value_state=None, position_bias) matching the PyTorch module's
    output tuple for has_relative_attention_bias=True.
    The optional `mask` follows the module contract: an additive float mask broadcastable
    to (B, H, S, S) with large-negative (but bf16-representable, e.g. -1e9) masked entries.
    """
    B, S, D = hidden_states.shape
    inner = n_heads * d_kv
    legacy = _is_legacy_tpu()

    if exp_dtype is None:
        # bf16 EUP on v6e/v7x roughly doubles exp throughput; v5-and-older lack it.
        exp_dtype = jnp.float32 if legacy else jnp.bfloat16

    tk = kv_tile if kv_tile is not None else _pick_tile(S, 128)
    tq = q_tile if q_tile is not None else _pick_tile(S, 128 if legacy else 256)
    if q_tile is None and B * (S // tq) < 2 and tq > tk:
        tq = tk    # keep >= 2 parallel grid entries so both v7x TensorCores get work
    assert S % tq == 0 and S % tk == 0

    # ---- relative position bias (tiny integer glue in plain JAX) ----
    position_bias = compute_position_bias(params['rel_attn_bias'], S, S, num_buckets,
                                          bidirectional=not is_decoder)[None]   # (1,H,S,S)
    if mask is not None:
        position_bias = position_bias + mask                                    # (B?,H,S,S)

    use_dedup = (mask is None) and (tq % tk == 0)
    if use_dedup:
        bias_arr, offs, mtile = compute_position_bias_diag_tiles(
            params['rel_attn_bias'], S, tq, tk, num_buckets,
            bidirectional=not is_decoder)
        bias_arr = bias_arr.astype(compute_dtype)              # (n_diag, H, tq, tk)
        bias_index = lambda b, iq, ik: (ik - mtile * iq + offs, 0, 0, 0)
    else:
        bias_arr = position_bias.astype(compute_dtype)         # (Bb, H, S, S)
        Bb = bias_arr.shape[0]
        if Bb == B and B > 1:
            bias_index = lambda b, iq, ik: (b, 0, iq, ik)
        else:
            bias_index = lambda b, iq, ik: (0, 0, iq, ik)

    # low-precision compute copies (all matmuls accumulate in f32 inside the kernels)
    x = hidden_states.astype(compute_dtype)
    wq = params['wq'].astype(compute_dtype)                    # (D, inner)
    wk = params['wk'].astype(compute_dtype)
    wv = params['wv'].astype(compute_dtype)
    wo = params['wo'].astype(compute_dtype)                    # (inner, D)

    # ---- kernel 1: QKV projection, grid (batch, seq-tiles) ----
    ts = tq
    q_proj, k_proj, v_proj = pl.pallas_call(
        qkv_proj_kernel,
        out_shape=tuple(jax.ShapeDtypeStruct((B, S, inner), compute_dtype)
                        for _ in range(3)),
        grid_spec=pltpu.PrefetchScalarGridSpec(
            num_scalar_prefetch=0,
            grid=(B, S // ts),
            in_specs=[
                pl.BlockSpec((1, ts, D), lambda b, i: (b, i, 0)),
                pl.BlockSpec((D, inner), lambda b, i: (0, 0)),
                pl.BlockSpec((D, inner), lambda b, i: (0, 0)),
                pl.BlockSpec((D, inner), lambda b, i: (0, 0)),
            ],
            out_specs=tuple(pl.BlockSpec((1, ts, inner), lambda b, i: (b, i, 0))
                            for _ in range(3))),
        compiler_params=pltpu.CompilerParams(
            dimension_semantics=("parallel", "parallel"),
            vmem_limit_bytes=VMEM_LIMIT_BYTES),
        cost_estimate=pl.CostEstimate(
            flops=2 * B * S * D * 3 * inner,
            transcendentals=0,
            bytes_accessed=2 * (B * S * D + 3 * D * inner + 3 * B * S * inner)),
    )(x, wq, wk, wv)

    # ---- kernel 2: flash attention + bias + O projection ----
    # Deeper pipelining of the streamed kv/bias tiles on bandwidth-poor v5e.
    deep = legacy and (S // tk) >= 3

    def _stream_spec(shape, index_map):
        if deep:
            return pl.BlockSpec(shape, index_map, pipeline_mode=pl.Buffered(3))
        return pl.BlockSpec(shape, index_map)

    bias_bytes = int(bias_arr.size) * 2
    context = pl.pallas_call(
        functools.partial(flash_attn_o_kernel, n_heads=n_heads, d_kv=d_kv,
                          exp_dtype=exp_dtype),
        out_shape=jax.ShapeDtypeStruct((B, S, D), hidden_states.dtype),
        grid_spec=pltpu.PrefetchScalarGridSpec(
            num_scalar_prefetch=0,
            grid=(B, S // tq, S // tk),
            in_specs=[
                pl.BlockSpec((1, tq, inner), lambda b, iq, ik: (b, iq, 0)),     # q tile
                _stream_spec((1, tk, inner), lambda b, iq, ik: (b, ik, 0)),     # k tile
                _stream_spec((1, tk, inner), lambda b, iq, ik: (b, ik, 0)),     # v tile
                _stream_spec((1, n_heads, tq, tk), bias_index),                 # bias tile
                pl.BlockSpec((inner, D), lambda b, iq, ik: (0, 0)),             # Wo
            ],
            out_specs=pl.BlockSpec((1, tq, D), lambda b, iq, ik: (b, iq, 0)),
            scratch_shapes=[
                pltpu.VMEM((tq, n_heads), jnp.float32),    # running max  m
                pltpu.VMEM((tq, n_heads), jnp.float32),    # running sum  l
                pltpu.VMEM((tq, inner), jnp.float32),      # lane-dense ctx accumulator
            ]),
        compiler_params=pltpu.CompilerParams(
            dimension_semantics=("parallel", "parallel", "arbitrary"),
            vmem_limit_bytes=VMEM_LIMIT_BYTES),
        cost_estimate=pl.CostEstimate(
            flops=4 * B * n_heads * S * S * d_kv + 2 * B * S * inner * D,
            transcendentals=B * n_heads * S * S,
            bytes_accessed=(2 * (3 * B * S * inner + inner * D)
                            + bias_bytes + 2 * B * S * D)),
    )(q_proj, k_proj, v_proj, bias_arr, wo)

    # present_key_value_state is None (encoder / no cache)
    return context, None, position_bias


# --------------------------------- reference ------------------------------------

def reference_t5_attention(hidden_states, params, *, n_heads, d_kv, num_buckets,
                           is_decoder=False, mask=None):
    B, S, D = hidden_states.shape
    q = hidden_states @ params['wq']
    k = hidden_states @ params['wk']
    v = hidden_states @ params['wv']

    def shape(t):
        return jnp.transpose(t.reshape(B, S, n_heads, d_kv), (0, 2, 1, 3))

    qh, kh, vh = shape(q), shape(k), shape(v)
    scores = jnp.einsum('bnqd,bnkd->bnqk', qh, kh)
    bias = compute_position_bias(params['rel_attn_bias'], S, S, num_buckets,
                                 bidirectional=not is_decoder)[None]
    if mask is not None:
        bias = bias + mask
    scores = scores + bias
    weights = jax.nn.softmax(scores.astype(jnp.float32), axis=-1)
    ctx = jnp.einsum('bnqk,bnkd->bnqd', weights, vh)
    ctx = jnp.transpose(ctx, (0, 2, 1, 3)).reshape(B, S, n_heads * d_kv)
    return ctx @ params['wo']


# ----------------------------------- main ---------------------------------------

def _run_case(key, *, batch, seq, d_model, d_kv, n_heads, num_buckets,
              q_tile=None, kv_tile=None, use_mask=False, tol=5e-2):
    inner = n_heads * d_kv
    k_h, k_q, k_k, k_v, k_o, k_b = jax.random.split(key, 6)
    hidden = jax.random.normal(k_h, (batch, seq, d_model), jnp.float32)
    params = {
        # stored pre-transposed: y = x @ W  (PyTorch Linear: y = x @ weight.T)
        'wq': 0.1 * jax.random.normal(k_q, (d_model, inner), jnp.float32),
        'wk': 0.1 * jax.random.normal(k_k, (d_model, inner), jnp.float32),
        'wv': 0.1 * jax.random.normal(k_v, (d_model, inner), jnp.float32),
        'wo': 0.1 * jax.random.normal(k_o, (inner, d_model), jnp.float32),
        'rel_attn_bias': 0.1 * jax.random.normal(
            k_b, (num_buckets, n_heads), jnp.float32),
    }

    mask = None
    if use_mask:
        m = jnp.zeros((batch, 1, 1, seq), jnp.float32)
        m = m.at[1:, :, :, seq - 2:].set(-1e9)   # mask last 2 kv positions of batch>=1
        mask = m

    ctx, _, _bias = t5_attention(hidden, params, n_heads=n_heads, d_kv=d_kv,
                                 num_buckets=num_buckets, is_decoder=False,
                                 mask=mask, q_tile=q_tile, kv_tile=kv_tile)
    ctx = jax.block_until_ready(ctx)

    ref = reference_t5_attention(hidden, params, n_heads=n_heads, d_kv=d_kv,
                                 num_buckets=num_buckets, is_decoder=False, mask=mask)
    max_err = float(jnp.max(jnp.abs(ctx - ref)))
    # bf16 weights/activations (+ bf16 exp on v6e/v7x) with f32 accumulation.
    assert jnp.allclose(ctx, ref, atol=tol, rtol=tol), max_err
    return max_err


if __name__ == "__main__":
    key = jax.random.PRNGKey(0)
    k1, k2, k3, k4 = jax.random.split(key, 4)

    # Small config implied by the module (single q/kv tile, full-array blocks, dedup bias).
    _run_case(k1, batch=2, seq=8, d_model=32, d_kv=8, n_heads=4, num_buckets=32)

    # Larger config with chip-dependent default tiling (tq=256/tk=128 on v6e/v7x,
    # 128/128 on v5e): online softmax across kv tiles + deduplicated bias stream.
    _run_case(k2, batch=2, seq=256, d_model=64, d_kv=16, n_heads=4, num_buckets=32)

    # Explicit 128x128 tiling: 2 q-tiles x 2 kv-tiles, exercises negative bias diagonals.
    _run_case(k3, batch=2, seq=256, d_model=64, d_kv=16, n_heads=4, num_buckets=32,
              q_tile=128, kv_tile=128)

    # Additive padding mask -> per-batch full-bias fallback path.
    _run_case(k4, batch=2, seq=8, d_model=32, d_kv=8, n_heads=4, num_buckets=32,
              use_mask=True)

    print("KERNEL_OK")
</pallas_src>

<mosaic_0001>
module attributes {stable_mosaic.version = 11 : i64} {
  func.func @qkv_proj_kernel(%arg0: i32, %arg1: i32, %arg2: memref<1x8x32xbf16, #tpu.memory_space<vmem>>, %arg3: memref<32x32xbf16, #tpu.memory_space<vmem>>, %arg4: memref<32x32xbf16, #tpu.memory_space<vmem>>, %arg5: memref<32x32xbf16, #tpu.memory_space<vmem>>, %arg6: memref<1x8x32xbf16, #tpu.memory_space<vmem>>, %arg7: memref<1x8x32xbf16, #tpu.memory_space<vmem>>, %arg8: memref<1x8x32xbf16, #tpu.memory_space<vmem>>) attributes {dimension_semantics = [#tpu.dimension_semantics<parallel>, #tpu.dimension_semantics<parallel>], iteration_bounds = array<i64: 2, 1>, scalar_prefetch = 0 : i64, scratch_operands = 0 : i64, tpu.core_type = #tpu.core_type<tc>, window_params = [{transform_indices = @transform_0, window_bounds = array<i64: 1, 8, 32>}, {pipeline_mode = #tpu.pipeline_mode<synchronous>, transform_indices = @transform_1, window_bounds = array<i64: 32, 32>}, {pipeline_mode = #tpu.pipeline_mode<synchronous>, transform_indices = @transform_2, window_bounds = array<i64: 32, 32>}, {pipeline_mode = #tpu.pipeline_mode<synchronous>, transform_indices = @transform_3, window_bounds = array<i64: 32, 32>}, {transform_indices = @transform_4, window_bounds = array<i64: 1, 8, 32>}, {transform_indices = @transform_5, window_bounds = array<i64: 1, 8, 32>}, {transform_indices = @transform_6, window_bounds = array<i64: 1, 8, 32>}]} {
    %c0 = arith.constant 0 : index
    %c0_0 = arith.constant 0 : index
    %c0_1 = arith.constant 0 : index
    %0 = vector.load %arg2[%c0, %c0_0, %c0_1] : memref<1x8x32xbf16, #tpu.memory_space<vmem>>, vector<1x8x32xbf16>
    %1 = vector.shape_cast %0 : vector<1x8x32xbf16> to vector<8x32xbf16>
    %c0_2 = arith.constant 0 : index
    %c0_3 = arith.constant 0 : index
    %2 = vector.load %arg3[%c0_2, %c0_3] : memref<32x32xbf16, #tpu.memory_space<vmem>>, vector<32x32xbf16>
    %cst = arith.constant dense<0.000000e+00> : vector<8x32xf32>
    %3 = tpu.matmul %1, %2, %cst {dimension_numbers = #tpu.dot_dimension_numbers<[1], [0], [0], [1], [0, 0, 1, 1], [], []>} : vector<8x32xbf16>, vector<32x32xbf16>, vector<8x32xf32> -> vector<8x32xf32>
    %4 = arith.truncf %3 : vector<8x32xf32> to vector<8x32xbf16>
    %c0_4 = arith.constant 0 : index
    %c0_5 = arith.constant 0 : index
    %c0_6 = arith.constant 0 : index
    %5 = vector.load %arg6[%c0_4, %c0_5, %c0_6] : memref<1x8x32xbf16, #tpu.memory_space<vmem>>, vector<1x8x32xbf16>
    %6 = vector.shape_cast %5 : vector<1x8x32xbf16> to vector<8x32xbf16>
    %7 = vector.shape_cast %4 : vector<8x32xbf16> to vector<1x8x32xbf16>
    tpu.vector_store %arg6[%c0_4, %c0_5, %c0_6], %7 {strides = array<i32>} : memref<1x8x32xbf16, #tpu.memory_space<vmem>>, vector<1x8x32xbf16>,
    %c0_7 = arith.constant 0 : index
    %c0_8 = arith.constant 0 : index
    %8 = vector.load %arg4[%c0_7, %c0_8] : memref<32x32xbf16, #tpu.memory_space<vmem>>, vector<32x32xbf16>
    %cst_9 = arith.constant dense<0.000000e+00> : vector<8x32xf32>
    %9 = tpu.matmul %1, %8, %cst_9 {dimension_numbers = #tpu.dot_dimension_numbers<[1], [0], [0], [1], [0, 0, 1, 1], [], []>} : vector<8x32xbf16>, vector<32x32xbf16>, vector<8x32xf32> -> vector<8x32xf32>
    %10 = arith.truncf %9 : vector<8x32xf32> to vector<8x32xbf16>
    %c0_10 = arith.constant 0 : index
    %c0_11 = arith.constant 0 : index
    %c0_12 = arith.constant 0 : index
    %11 = vector.load %arg7[%c0_10, %c0_11, %c0_12] : memref<1x8x32xbf16, #tpu.memory_space<vmem>>, vector<1x8x32xbf16>
    %12 = vector.shape_cast %11 : vector<1x8x32xbf16> to vector<8x32xbf16>
    %13 = vector.shape_cast %10 : vector<8x32xbf16> to vector<1x8x32xbf16>
    tpu.vector_store %arg7[%c0_10, %c0_11, %c0_12], %13 {strides = array<i32>} : memref<1x8x32xbf16, #tpu.memory_space<vmem>>, vector<1x8x32xbf16>,
    %c0_13 = arith.constant 0 : index
    %c0_14 = arith.constant 0 : index
    %14 = vector.load %arg5[%c0_13, %c0_14] : memref<32x32xbf16, #tpu.memory_space<vmem>>, vector<32x32xbf16>
    %cst_15 = arith.constant dense<0.000000e+00> : vector<8x32xf32>
    %15 = tpu.matmul %1, %14, %cst_15 {dimension_numbers = #tpu.dot_dimension_numbers<[1], [0], [0], [1], [0, 0, 1, 1], [], []>} : vector<8x32xbf16>, vector<32x32xbf16>, vector<8x32xf32> -> vector<8x32xf32>
    %16 = arith.truncf %15 : vector<8x32xf32> to vector<8x32xbf16>
    %c0_16 = arith.constant 0 : index
    %c0_17 = arith.constant 0 : index
    %c0_18 = arith.constant 0 : index
    %17 = vector.load %arg8[%c0_16, %c0_17, %c0_18] : memref<1x8x32xbf16, #tpu.memory_space<vmem>>, vector<1x8x32xbf16>
    %18 = vector.shape_cast %17 : vector<1x8x32xbf16> to vector<8x32xbf16>
    %19 = vector.shape_cast %16 : vector<8x32xbf16> to vector<1x8x32xbf16>
    tpu.vector_store %arg8[%c0_16, %c0_17, %c0_18], %19 {strides = array<i32>} : memref<1x8x32xbf16, #tpu.memory_space<vmem>>, vector<1x8x32xbf16>,
    return
  }
  func.func @transform_0(%arg0: i32, %arg1: i32) -> (i32, i32, i32) {
    %c0_i32 = arith.constant 0 : i32
    %c0_i32_0 = arith.constant 0 : i32
    return %arg0, %arg1, %c0_i32 : i32, i32, i32
  }
  func.func @transform_1(%arg0: i32, %arg1: i32) -> (i32, i32) {
    %c0_i32 = arith.constant 0 : i32
    %c0_i32_0 = arith.constant 0 : i32
    %c0_i32_1 = arith.constant 0 : i32
    return %c0_i32, %c0_i32_0 : i32, i32
  }
  func.func @transform_2(%arg0: i32, %arg1: i32) -> (i32, i32) {
    %c0_i32 = arith.constant 0 : i32
    %c0_i32_0 = arith.constant 0 : i32
    %c0_i32_1 = arith.constant 0 : i32
    return %c0_i32, %c0_i32_0 : i32, i32
  }
  func.func @transform_3(%arg0: i32, %arg1: i32) -> (i32, i32) {
    %c0_i32 = arith.constant 0 : i32
    %c0_i32_0 = arith.constant 0 : i32
    %c0_i32_1 = arith.constant 0 : i32
    return %c0_i32, %c0_i32_0 : i32, i32
  }
  func.func @transform_4(%arg0: i32, %arg1: i32) -> (i32, i32, i32) {
    %c0_i32 = arith.constant 0 : i32
    %c0_i32_0 = arith.constant 0 : i32
    return %arg0, %arg1, %c0_i32 : i32, i32, i32
  }
  func.func @transform_5(%arg0: i32, %arg1: i32) -> (i32, i32, i32) {
    %c0_i32 = arith.constant 0 : i32
    %c0_i32_0 = arith.constant 0 : i32
    return %arg0, %arg1, %c0_i32 : i32, i32, i32
  }
  func.func @transform_6(%arg0: i32, %arg1: i32) -> (i32, i32, i32) {
    %c0_i32 = arith.constant 0 : i32
    %c0_i32_0 = arith.constant 0 : i32
    return %arg0, %arg1, %c0_i32 : i32, i32, i32
  }
}

</mosaic_0001>

<llo_original>
// kernel: tpu_custom_call.1
$region0: #{tpu_custom_call.1}
  #allocation0 [shape = 'u32[]', space=smem, size = 0x4, offset = 0x4, fixed_abs, tag = 'smem constant byte address 0x4 - core index']
  #allocation1 [shape = 'u32[144,128]{1,0:T(1,128)}', space=vmem, size = 0x12000, scoped, tag = 'internal scratch']
  %s0 = inlined_call_operand.hbm [shape: bf16[2,8,32], index: 0, kind: input, shape index: {}]
  %s1 = inlined_call_operand.hbm [shape: bf16[32,32], index: 1, kind: input, shape index: {}]
  %s2 = inlined_call_operand.hbm [shape: bf16[32,32], index: 2, kind: input, shape index: {}]
  %s3 = inlined_call_operand.hbm [shape: bf16[32,32], index: 3, kind: input, shape index: {}]
  %s4 = inlined_call_operand.hbm [shape: bf16[2,8,32], index: 4, kind: output, shape index: {0}]
  %s5 = inlined_call_operand.hbm [shape: bf16[2,8,32], index: 5, kind: output, shape index: {1}]
  %s6 = inlined_call_operand.hbm [shape: bf16[2,8,32], index: 6, kind: output, shape index: {2}]
  %7 = xla_tuple %s4, %s5, %s6
  %s8 = sld [smem:[#allocation0]]
  $region81: #{tpu_custom_call.1} parent=0
    _
  %s10 = ssub.s32 1, %s8
  %s11 = scalar_select 0, %s10, %s8
  $region1: #{tpu_custom_call.1} parent=0
    #allocation2 [shape = 'u8[4096]{0}', space=vmem, size = 0x1000, scoped, tag = 'input window, operand 0']
    #allocation3 [shape = 's32[2]{0}', space=sflag, size = 0x8, scoped, tag = 'scoped memory for tpu_custom_call.1']
    #allocation4 [shape = 's32[2]{0}', space=sflag, size = 0x8, scoped, tag = 'scoped memory for tpu_custom_call.1']
    #allocation5 [shape = 'u8[8192]{0}', space=vmem, size = 0x2000, scoped, tag = 'input window, operand 1, single buffered']
    #allocation6 [shape = 's32[1]{0}', space=sflag, size = 0x4, scoped, tag = 'scoped memory for tpu_custom_call.1']
    #allocation7 [shape = 'u8[8192]{0}', space=vmem, size = 0x2000, scoped, tag = 'input window, operand 2, single buffered']
    #allocation8 [shape = 'u8[8192]{0}', space=vmem, size = 0x2000, scoped, tag = 'input window, operand 3, single buffered']
    #allocation9 [shape = 's32[1]{0}', space=sflag, size = 0x4, scoped, tag = 'scoped memory for tpu_custom_call.1']
    #allocation10 [shape = 'u8[4096]{0}', space=vmem, size = 0x1000, scoped, tag = 'output window, operand 0']
    #allocation11 [shape = 'u8[4096]{0}', space=vmem, size = 0x1000, scoped, tag = 'output window, operand 1']
    #allocation12 [shape = 's32[2]{0}', space=sflag, size = 0x8, scoped, tag = 'scoped memory for tpu_custom_call.1']
    #allocation13 [shape = 'u8[4096]{0}', space=vmem, size = 0x1000, scoped, tag = 'output window, operand 2']
    %12 = vsyncpa [#allocation3], 0
    %s13 = scalar_lea.sflag [#allocation3], 1
    %14 = vsyncpa %s13, 0
    %15 = vsyncpa [#allocation6], 0
    %16 = vsyncpa [#allocation9], 0
    %17 = vsyncpa [#allocation4], 0
    %s18 = scalar_lea.sflag [#allocation4], 1
    %19 = vsyncpa %s18, 0
    %20 = vsyncpa [#allocation12], 0
    %s21 = scalar_lea.sflag [#allocation12], 1
    %22 = vsyncpa %s21, 0
    loop: start=0, step=1, limit=4
    $region2: #{tpu_custom_call.1} parent=1 // loop_pre_header
      _
    $region3: #{tpu_custom_call.1} parent=1 // loop_header
      %s24 = sphi 0, %s28
      %p25 = scmp.ge.s32.totalorder %s24, 4
      %s31 = sphi 0, %s43
      %s32 = sphi 0, %s39
      %s33 = sphi 0, %s31
      %s34 = sphi 0, %s32
      %s35 = sphi 0, %s33
      %s36 = sphi 0, %s34
      %s48 = sphi 0, %s50
      %s51 = sphi 0, %s48
      %s52 = sphi 0, %s51
      %s68 = sphi 0, %s52
      %s72 = sphi 0, %s72
      %s74 = sphi 0, %s72
      %s75 = sphi 0, %s74
      %s89 = sphi 0, %s75
      %s93 = sphi 0, %s93
      %s95 = sphi 0, %s93
      %s96 = sphi 0, %s95
      %s110 = sphi 0, %s96
      %s114 = sphi 0, %s114
      %s116 = sphi 0, %s114
      %s117 = sphi 0, %s116
      %s131 = sphi 0, %s117
      %s139 = sphi 0, %s141
      %s142 = sphi 0, %s139
      %s143 = sphi 0, %s142
      %s159 = sphi 0, %s143
      %s167 = sphi 0, %s169
      %s170 = sphi 0, %s167
      %s171 = sphi 0, %s170
      %s187 = sphi 0, %s171
      %s195 = sphi 0, %s197
      %s198 = sphi 0, %s195
      %s199 = sphi 0, %s198
      %s215 = sphi 0, %s199
    $region4: #{tpu_custom_call.1} parent=1 // loop_header_branch
      %27 = sbr.rel (%p25) target = $region8
    $region5: #{tpu_custom_call.1} parent=1 // loop_body
      %s29 = ssub.s32 %s24, 1
      %s30 = ssub.s32 %s24, 2
      %s37 = sadd.s32 1, %s32
      %p38 = scmp.ge.s32.totalorder %s37, 1
      %s39 = scalar_select %p38, 0, %s37
      %s40 = sadd.s32 1, %s31
      %s41 = scalar_select %p38, %s40, %s31
      %p42 = scmp.ge.s32.totalorder %s41, 2
      %s43 = scalar_select %p42, 0, %s41
      %s44 = ssub.s32 %s31, %s43
      %s45 = ssub.s32 %s32, %s39
      %s46 = sor.u32 %s44, %s45
      %p47 = scmp.eq.s32.totalorder %s46, 0
      %s49 = sadd.s32 %s48, 1
      %s50 = scalar_select %p47, %s48, %s49
      %p53 = pneg %p47
      %p54 = scmp.eq.s32.totalorder %s24, 1
      %p55 = por %p53, %p54
      %p56 = scmp.ne.s32.totalorder %s48, %s51
      %p57 = scmp.eq.s32.totalorder %s24, 0
      %p58 = por %p56, %p57
      %p59 = scmp.ne.s32.totalorder %s48, %s51
      %p60 = scmp.eq.s32.totalorder %s29, 1
      %p61 = por %p59, %p60
      %p62 = scmp.ne.s32.totalorder %s51, %s52
      %p63 = scmp.eq.s32.totalorder %s29, 0
      %p64 = por %p62, %p63
      %p65 = scmp.ne.s32.totalorder %s51, %s52
      %p66 = scmp.eq.s32.totalorder %s30, 1
      %p67 = por %p65, %p66
      %p69 = scmp.ne.s32.totalorder %s52, %s68
      %p70 = scmp.eq.s32.totalorder %s30, 0
      %p71 = por %p69, %p70
      %s73 = sadd.s32 %s72, 1
      %p76 = scmp.eq.s32.totalorder %s24, 1
      %p77 = scmp.ne.s32.totalorder %s72, %s74
      %p78 = scmp.eq.s32.totalorder %s24, 0
      %p79 = por %p77, %p78
      %p80 = scmp.ne.s32.totalorder %s72, %s74
      %p81 = scmp.eq.s32.totalorder %s29, 1
      %p82 = por %p80, %p81
      %p83 = scmp.ne.s32.totalorder %s74, %s75
      %p84 = scmp.eq.s32.totalorder %s29, 0
      %p85 = por %p83, %p84
      %p86 = scmp.ne.s32.totalorder %s74, %s75
      %p87 = scmp.eq.s32.totalorder %s30, 1
      %p88 = por %p86, %p87
      %p90 = scmp.ne.s32.totalorder %s75, %s89
      %p91 = scmp.eq.s32.totalorder %s30, 0
      %p92 = por %p90, %p91
      %s94 = sadd.s32 %s93, 1
      %p97 = scmp.eq.s32.totalorder %s24, 1
      %p98 = scmp.ne.s32.totalorder %s93, %s95
      %p99 = scmp.eq.s32.totalorder %s24, 0
      %p100 = por %p98, %p99
      %p101 = scmp.ne.s32.totalorder %s93, %s95
      %p102 = scmp.eq.s32.totalorder %s29, 1
      %p103 = por %p101, %p102
      %p104 = scmp.ne.s32.totalorder %s95, %s96
      %p105 = scmp.eq.s32.totalorder %s29, 0
      %p106 = por %p104, %p105
      %p107 = scmp.ne.s32.totalorder %s95, %s96
      %p108 = scmp.eq.s32.totalorder %s30, 1
      %p109 = por %p107, %p108
      %p111 = scmp.ne.s32.totalorder %s96, %s110
      %p112 = scmp.eq.s32.totalorder %s30, 0
      %p113 = por %p111, %p112
      %s115 = sadd.s32 %s114, 1
      %p118 = scmp.eq.s32.totalorder %s24, 1
      %p119 = scmp.ne.s32.totalorder %s114, %s116
      %p120 = scmp.eq.s32.totalorder %s24, 0
      %p121 = por %p119, %p120
      %p122 = scmp.ne.s32.totalorder %s114, %s116
      %p123 = scmp.eq.s32.totalorder %s29, 1
      %p124 = por %p122, %p123
      %p125 = scmp.ne.s32.totalorder %s116, %s117
      %p126 = scmp.eq.s32.totalorder %s29, 0
      %p127 = por %p125, %p126
      %p128 = scmp.ne.s32.totalorder %s116, %s117
      %p129 = scmp.eq.s32.totalorder %s30, 1
      %p130 = por %p128, %p129
      %p132 = scmp.ne.s32.totalorder %s117, %s131
      %p133 = scmp.eq.s32.totalorder %s30, 0
      %p134 = por %p132, %p133
      %s135 = ssub.s32 %s31, %s43
      %s136 = ssub.s32 %s32, %s39
      %s137 = sor.u32 %s135, %s136
      %p138 = scmp.eq.s32.totalorder %s137, 0
      %s140 = sadd.s32 %s139, 1
      %s141 = scalar_select %p138, %s139, %s140
      %p144 = pneg %p138
      %p145 = scmp.eq.s32.totalorder %s24, 1
      %p146 = por %p144, %p145
      %p147 = scmp.ne.s32.totalorder %s139, %s142
      %p148 = scmp.eq.s32.totalorder %s24, 0
      %p149 = por %p147, %p148
      %p150 = scmp.ne.s32.totalorder %s139, %s142
      %p151 = scmp.eq.s32.totalorder %s29, 1
      %p152 = por %p150, %p151
      %p153 = scmp.ne.s32.totalorder %s142, %s143
      %p154 = scmp.eq.s32.totalorder %s29, 0
      %p155 = por %p153, %p154
      %p156 = scmp.ne.s32.totalorder %s142, %s143
      %p157 = scmp.eq.s32.totalorder %s30, 1
      %p158 = por %p156, %p157
      %p160 = scmp.ne.s32.totalorder %s143, %s159
      %p161 = scmp.eq.s32.totalorder %s30, 0
      %p162 = por %p160, %p161
      %s163 = ssub.s32 %s31, %s43
      %s164 = ssub.s32 %s32, %s39
      %s165 = sor.u32 %s163, %s164
      %p166 = scmp.eq.s32.totalorder %s165, 0
      %s168 = sadd.s32 %s167, 1
      %s169 = scalar_select %p166, %s167, %s168
      %p172 = pneg %p166
      %p173 = scmp.eq.s32.totalorder %s24, 1
      %p174 = por %p172, %p173
      %p175 = scmp.ne.s32.totalorder %s167, %s170
      %p176 = scmp.eq.s32.totalorder %s24, 0
      %p177 = por %p175, %p176
      %p178 = scmp.ne.s32.totalorder %s167, %s170
      %p179 = scmp.eq.s32.totalorder %s29, 1
      %p180 = por %p178, %p179
      %p181 = scmp.ne.s32.totalorder %s170, %s171
      %p182 = scmp.eq.s32.totalorder %s29, 0
      %p183 = por %p181, %p182
      %p184 = scmp.ne.s32.totalorder %s170, %s171
      %p185 = scmp.eq.s32.totalorder %s30, 1
      %p186 = por %p184, %p185
      %p188 = scmp.ne.s32.totalorder %s171, %s187
      %p189 = scmp.eq.s32.totalorder %s30, 0
      %p190 = por %p188, %p189
      %s191 = ssub.s32 %s31, %s43
      %s192 = ssub.s32 %s32, %s39
      %s193 = sor.u32 %s191, %s192
      %p194 = scmp.eq.s32.totalorder %s193, 0
      %s196 = sadd.s32 %s195, 1
      %s197 = scalar_select %p194, %s195, %s196
      %p200 = pneg %p194
      %p201 = scmp.eq.s32.totalorder %s24, 1
      %p202 = por %p200, %p201
      %p203 = scmp.ne.s32.totalorder %s195, %s198
      %p204 = scmp.eq.s32.totalorder %s24, 0
      %p205 = por %p203, %p204
      %p206 = scmp.ne.s32.totalorder %s195, %s198
      %p207 = scmp.eq.s32.totalorder %s29, 1
      %p208 = por %p206, %p207
      %p209 = scmp.ne.s32.totalorder %s198, %s199
      %p210 = scmp.eq.s32.totalorder %s29, 0
      %p211 = por %p209, %p210
      %p212 = scmp.ne.s32.totalorder %s198, %s199
      %p213 = scmp.eq.s32.totalorder %s30, 1
      %p214 = por %p212, %p213
      %p216 = scmp.ne.s32.totalorder %s199, %s215
      %p217 = scmp.eq.s32.totalorder %s30, 0
      %p218 = por %p216, %p217
      %p219 = scmp.le.s32.totalorder 1, %s24
      %p220 = scmp.lt.s32.totalorder %s24, 3
      %p221 = pnand %p219, %p220
      %p222 = pneg %p221
      // Predicated region
      $region9: #{tpu_custom_call.1} parent=5 // pred_check
        _
      $region10: #{tpu_custom_call.1} parent=5 // pred_check_branch
        %224 = sbr.rel (%p221) target = $region12
      $region11: #{tpu_custom_call.1} parent=5 // pred_region
        %s225 = ssub.s32 %s24, 1
        // Predicated region
        $region13: #{tpu_custom_call.1} parent=11 // pred_check
          %p226 = pneg %p85
        $region14: #{tpu_custom_call.1} parent=11 // pred_check_branch
          %228 = sbr.rel (%p226) target = $region16
        $region15: #{tpu_custom_call.1} parent=11 // pred_region
          %s230 = ssub.s32 256, 256
          %231 = vsyncadd [#allocation6], %s230
          %s232 = sshll.u32 [#allocation5], 4
          %s233 = int_to_ptr.vmem [resolvable:$true] %s232
          %238 = dma.hbm_to_vmem [thread:$0]  %s1, 256, %s233, [#allocation6], 64, 64, 4
        $region16: #{tpu_custom_call.1} parent=11 // pred_fallthru
          _
        // Predicated region
        $region17: #{tpu_custom_call.1} parent=11 // pred_check
          %p239 = pneg %p106
        $region18: #{tpu_custom_call.1} parent=11 // pred_check_branch
          %241 = sbr.rel (%p239) target = $region20
        $region19: #{tpu_custom_call.1} parent=11 // pred_region
          %s243 = ssub.s32 256, 256
          %244 = vsyncadd [#allocation6], %s243
          %s245 = sshll.u32 [#allocation7], 4
          %s246 = int_to_ptr.vmem [resolvable:$true] %s245
          %251 = dma.hbm_to_vmem [thread:$0]  %s2, 256, %s246, [#allocation6], 64, 64, 4
        $region20: #{tpu_custom_call.1} parent=11 // pred_fallthru
          _
        // Predicated region
        $region21: #{tpu_custom_call.1} parent=11 // pred_check
          %p252 = pneg %p127
        $region22: #{tpu_custom_call.1} parent=11 // pred_check_branch
          %254 = sbr.rel (%p252) target = $region24
        $region23: #{tpu_custom_call.1} parent=11 // pred_region
          %s256 = ssub.s32 256, 256
          %257 = vsyncadd [#allocation9], %s256
          %s258 = sshll.u32 [#allocation8], 4
          %s259 = int_to_ptr.vmem [resolvable:$true] %s258
          %264 = dma.hbm_to_vmem [thread:$0]  %s3, 256, %s259, [#allocation9], 64, 64, 4
        $region24: #{tpu_custom_call.1} parent=11 // pred_fallthru
          _
      $region12: #{tpu_custom_call.1} parent=5 // pred_fallthru
        _
      %p265 = scmp.lt.s32.totalorder %s24, 2
      // Predicated region
      $region25: #{tpu_custom_call.1} parent=5 // pred_check
        %p266 = pneg %p265
      $region26: #{tpu_custom_call.1} parent=5 // pred_check_branch
        %268 = sbr.rel (%p266) target = $region28
      $region27: #{tpu_custom_call.1} parent=5 // pred_region
        // Predicated region
        $region29: #{tpu_custom_call.1} parent=27 // pred_check
          %p269 = pneg %p58
        $region30: #{tpu_custom_call.1} parent=27 // pred_check_branch
          %271 = sbr.rel (%p269) target = $region32
        $region31: #{tpu_custom_call.1} parent=27 // pred_region
          %s272 = sand.u32 %s48, 1
          %s273 = scalar_lea.sflag [#allocation3], %s272
          %s274 = sand.u32 %s48, 1
          %s275 = smul.addr %s274, 4
          %s276 = scalar_lea.vmem [#allocation2], %s275
          %s278 = ssub.s32 64, 64
          %279 = vsyncadd %s273, %s278
          %s280 = sadd.s32 %s32, %s31
          %s281 = smul.addr %s280, 64
          %s282 = scalar_lea.hbm %s0, %s281
          %s284 = sshll.u32 %s276, 4
          %s285 = int_to_ptr.vmem [resolvable:$true] %s284
          %287 = dma.hbm_to_vmem [thread:$0]  %s282, 64, %s285, %s273
        $region32: #{tpu_custom_call.1} parent=27 // pred_fallthru
          _
      $region28: #{tpu_custom_call.1} parent=5 // pred_fallthru
        _
      %p288 = scmp.le.s32.totalorder 1, %s24
      %p289 = scmp.lt.s32.totalorder %s24, 3
      %p290 = pnand %p288, %p289
      %p291 = pneg %p290
      // Predicated region
      $region33: #{tpu_custom_call.1} parent=5 // pred_check
        _
      $region34: #{tpu_custom_call.1} parent=5 // pred_check_branch
        %293 = sbr.rel (%p290) target = $region36
      $region35: #{tpu_custom_call.1} parent=5 // pred_region
        %s294 = ssub.s32 %s24, 1
        %s295 = sand.u32 %s51, 1
        %s296 = scalar_lea.sflag [#allocation3], %s295
        %s297 = sand.u32 %s51, 1
        %s298 = smul.addr %s297, 4
        %s299 = scalar_lea.vmem [#allocation2], %s298
        // Predicated region
        $region37: #{tpu_custom_call.1} parent=35 // pred_check
          %p300 = pneg %p64
        $region38: #{tpu_custom_call.1} parent=35 // pred_check_branch
          %302 = sbr.rel (%p300) target = $region40
        $region39: #{tpu_custom_call.1} parent=35 // pred_region
          %303 = dma.done %s296, 64
        $region40: #{tpu_custom_call.1} parent=35 // pred_fallthru
          _
        // Predicated region
        $region41: #{tpu_custom_call.1} parent=35 // pred_check
          %p304 = pneg %p85
        $region42: #{tpu_custom_call.1} parent=35 // pred_check_branch
          %306 = sbr.rel (%p304) target = $region44
        $region43: #{tpu_custom_call.1} parent=35 // pred_region
          %307 = dma.done [#allocation6], 256
        $region44: #{tpu_custom_call.1} parent=35 // pred_fallthru
          _
        // Predicated region
        $region45: #{tpu_custom_call.1} parent=35 // pred_check
          %p308 = pneg %p106
        $region46: #{tpu_custom_call.1} parent=35 // pred_check_branch
          %310 = sbr.rel (%p308) target = $region48
        $region47: #{tpu_custom_call.1} parent=35 // pred_region
          %311 = dma.done [#allocation6], 256
        $region48: #{tpu_custom_call.1} parent=35 // pred_fallthru
          _
        // Predicated region
        $region49: #{tpu_custom_call.1} parent=35 // pred_check
          %p312 = pneg %p127
        $region50: #{tpu_custom_call.1} parent=35 // pred_check_branch
          %314 = sbr.rel (%p312) target = $region52
        $region51: #{tpu_custom_call.1} parent=35 // pred_region
          %315 = dma.done [#allocation9], 256
        $region52: #{tpu_custom_call.1} parent=35 // pred_fallthru
          _
        %s316 = sand.u32 %s51, 1
        %s317 = scalar_lea.sflag [#allocation3], %s316
        %s318 = sand.u32 %s51, 1
        %s319 = smul.addr %s318, 4
        %s320 = scalar_lea.vmem [#allocation2], %s319
        %p321 = pneg %p64
        %p322 = pneg %p61
        %p323 = pneg %p85
        %p324 = pneg %p82
        %p325 = pneg %p106
        %p326 = pneg %p103
        %p327 = pneg %p127
        %p328 = pneg %p124
        %p329 = pneg %p155
        %p330 = pneg %p152
        %s331 = sand.u32 %s142, 1
        %s332 = scalar_lea.sflag [#allocation4], %s331
        %s333 = sand.u32 %s142, 1
        %s334 = smul.addr %s333, 4
        %s335 = scalar_lea.vmem [#allocation10], %s334
        %p336 = pneg %p183
        %p337 = pneg %p180
        %s338 = sand.u32 %s29, 1
        %s339 = scalar_lea.sflag [#allocation12], %s338
        %s340 = sand.u32 %s170, 1
        %s341 = smul.addr %s340, 4
        %s342 = scalar_lea.vmem [#allocation11], %s341
        %p343 = pneg %p211
        %p344 = pneg %p208
        %s345 = sand.u32 %s29, 1
        %s346 = scalar_lea.sflag [#allocation12], %s345
        %s347 = sand.u32 %s198, 1
        %s348 = smul.addr %s347, 4
        %s349 = scalar_lea.vmem [#allocation13], %s348
        %v351 = vld [vmem:[%s299] sm:$0xf]
        %v352 = vld [vmem:[#allocation5] sm:$0xf]
        %v353 = vld [vmem:[#allocation5 + $0x4] sm:$0xf]
        %v354 = vld [vmem:[#allocation5 + $0x8] sm:$0xf]
        %v355 = vld [vmem:[#allocation5 + $0xc] sm:$0xf]
        %v360 = vunpack.c.l.b16 %v352
        %v361 = vunpack.c.l.b16 %v353
        %v362 = vunpack.c.l.b16 %v354
        %v363 = vunpack.c.l.b16 %v355
        %v364 = vpack.c.b16 %v361, %v360
        %v365 = vpack.c.b16 %v363, %v362
        %vm368 = vcmask 261120
        %v370 = vsel %vm368, %v351, 0
        %372 = vmatprep.subr.bf16.mxu0 0
        %373 = vmatpush1.bf16.msra.mxu0 %v364
        %374 = vmatprep.subr.bf16.mxu0 0
        %375 = vmatpush1.bf16.msra.mxu0 %v365
        %376 = vmatprep.subr.bf16.mxu0 0
        %377 = vmatpush1.bf16.msra.mxu0 0
        %378 = vmatprep.subr.bf16.mxu0 0
        %379 = vmatpush1.bf16.msra.mxu0 0
        %380 = vmatprep.subr.bf16.mxu0 0
        %381 = vmatpush1.bf16.msra.mxu0 0
        %382 = vmatprep.subr.bf16.mxu0 0
        %383 = vmatpush1.bf16.msra.mxu0 0
        %384 = vmatprep.subr.bf16.mxu0 0
        %385 = vmatpush1.bf16.msra.mxu0 0
        %386 = vmatprep.subr.bf16.mxu0 0
        %387 = vmatpush1.bf16.msra.mxu0 0
        %388 = vmatprep.subr.bf16.mxu0 0
        %389 = vmatpush1.bf16.msra.mxu0 0
        %390 = vmatprep.subr.bf16.mxu0 0
        %391 = vmatpush1.bf16.msra.mxu0 0
        %392 = vmatprep.subr.bf16.mxu0 0
        %393 = vmatpush1.bf16.msra.mxu0 0
        %394 = vmatprep.subr.bf16.mxu0 0
        %395 = vmatpush1.bf16.msra.mxu0 0
        %396 = vmatprep.subr.bf16.mxu0 0
        %397 = vmatpush1.bf16.msra.mxu0 0
        %398 = vmatprep.subr.bf16.mxu0 0
        %399 = vmatpush1.bf16.msra.mxu0 0
        %400 = vmatprep.subr.bf16.mxu0 0
        %401 = vmatpush1.bf16.msra.mxu0 0
        %402 = vmatprep.subr.bf16.mxu0 0
        %403 = vmatpush1.bf16.msra.mxu0 0
        %404 = vmatprep.mubr.bf16.mxu0 0
        %405 = vmatmul.mubr.bf16.gmra.mrb[0].mxu0 %v370
        %v406 = vpop.f32.mrb[0].mxu0
        %v407 = vadd.f32 0.0, %v406
        %v408 = vpop.f32.mrb[0].mxu0
        %v409 = vpop.f32.mrb[0].mxu0
        %v410 = vpop.f32.mrb[0].mxu0
        %411 = vdwg.mxu0
        %v412 = vpack.c.bf16 %v407, %v407
        %vm413 = vcmask 257024
        %414 = vst.msk [vmem:[%s335] sm:$0xf] %vm413, %v412
        %v415 = vld [vmem:[#allocation7] sm:$0xf]
        %v416 = vld [vmem:[#allocation7 + $0x4] sm:$0xf]
        %v417 = vld [vmem:[#allocation7 + $0x8] sm:$0xf]
        %v418 = vld [vmem:[#allocation7 + $0xc] sm:$0xf]
        %v423 = vunpack.c.l.b16 %v415
        %v424 = vunpack.c.l.b16 %v416
        %v425 = vunpack.c.l.b16 %v417
        %v426 = vunpack.c.l.b16 %v418
        %v427 = vpack.c.b16 %v424, %v423
        %v428 = vpack.c.b16 %v426, %v425
        %431 = vmatprep.subr.bf16.mxu0 0
        %432 = vmatpush1.bf16.msra.mxu0 %v427
        %433 = vmatprep.subr.bf16.mxu0 0
        %434 = vmatpush1.bf16.msra.mxu0 %v428
        %435 = vmatprep.subr.bf16.mxu0 0
        %436 = vmatpush1.bf16.msra.mxu0 0
        %437 = vmatprep.subr.bf16.mxu0 0
        %438 = vmatpush1.bf16.msra.mxu0 0
        %439 = vmatprep.subr.bf16.mxu0 0
        %440 = vmatpush1.bf16.msra.mxu0 0
        %441 = vmatprep.subr.bf16.mxu0 0
        %442 = vmatpush1.bf16.msra.mxu0 0
        %443 = vmatprep.subr.bf16.mxu0 0
        %444 = vmatpush1.bf16.msra.mxu0 0
        %445 = vmatprep.subr.bf16.mxu0 0
        %446 = vmatpush1.bf16.msra.mxu0 0
        %447 = vmatprep.subr.bf16.mxu0 0
        %448 = vmatpush1.bf16.msra.mxu0 0
        %449 = vmatprep.subr.bf16.mxu0 0
        %450 = vmatpush1.bf16.msra.mxu0 0
        %451 = vmatprep.subr.bf16.mxu0 0
        %452 = vmatpush1.bf16.msra.mxu0 0
        %453 = vmatprep.subr.bf16.mxu0 0
        %454 = vmatpush1.bf16.msra.mxu0 0
        %455 = vmatprep.subr.bf16.mxu0 0
        %456 = vmatpush1.bf16.msra.mxu0 0
        %457 = vmatprep.subr.bf16.mxu0 0
        %458 = vmatpush1.bf16.msra.mxu0 0
        %459 = vmatprep.subr.bf16.mxu0 0
        %460 = vmatpush1.bf16.msra.mxu0 0
        %461 = vmatprep.subr.bf16.mxu0 0
        %462 = vmatpush1.bf16.msra.mxu0 0
        %463 = vmatprep.mubr.bf16.mxu0 0
        %464 = vmatmul.mubr.bf16.gmra.mrb[0].mxu0 %v370
        %v465 = vpop.f32.mrb[0].mxu0
        %v466 = vadd.f32 0.0, %v465
        %v467 = vpop.f32.mrb[0].mxu0
        %v468 = vpop.f32.mrb[0].mxu0
        %v469 = vpop.f32.mrb[0].mxu0
        %470 = vdwg.mxu0
        %v471 = vpack.c.bf16 %v466, %v466
        %472 = vst.msk [vmem:[%s342] sm:$0xf] %vm413, %v471
        %v473 = vld [vmem:[#allocation8] sm:$0xf]
        %v474 = vld [vmem:[#allocation8 + $0x4] sm:$0xf]
        %v475 = vld [vmem:[#allocation8 + $0x8] sm:$0xf]
        %v476 = vld [vmem:[#allocation8 + $0xc] sm:$0xf]
        %v481 = vunpack.c.l.b16 %v473
        %v482 = vunpack.c.l.b16 %v474
        %v483 = vunpack.c.l.b16 %v475
        %v484 = vunpack.c.l.b16 %v476
        %v485 = vpack.c.b16 %v482, %v481
        %v486 = vpack.c.b16 %v484, %v483
        %489 = vmatprep.subr.bf16.mxu0 0
        %490 = vmatpush1.bf16.msra.mxu0 %v485
        %491 = vmatprep.subr.bf16.mxu0 0
        %492 = vmatpush1.bf16.msra.mxu0 %v486
        %493 = vmatprep.subr.bf16.mxu0 0
        %494 = vmatpush1.bf16.msra.mxu0 0
        %495 = vmatprep.subr.bf16.mxu0 0
        %496 = vmatpush1.bf16.msra.mxu0 0
        %497 = vmatprep.subr.bf16.mxu0 0
        %498 = vmatpush1.bf16.msra.mxu0 0
        %499 = vmatprep.subr.bf16.mxu0 0
        %500 = vmatpush1.bf16.msra.mxu0 0
        %501 = vmatprep.subr.bf16.mxu0 0
        %502 = vmatpush1.bf16.msra.mxu0 0
        %503 = vmatprep.subr.bf16.mxu0 0
        %504 = vmatpush1.bf16.msra.mxu0 0
        %505 = vmatprep.subr.bf16.mxu0 0
        %506 = vmatpush1.bf16.msra.mxu0 0
        %507 = vmatprep.subr.bf16.mxu0 0
        %508 = vmatpush1.bf16.msra.mxu0 0
        %509 = vmatprep.subr.bf16.mxu0 0
        %510 = vmatpush1.bf16.msra.mxu0 0
        %511 = vmatprep.subr.bf16.mxu0 0
        %512 = vmatpush1.bf16.msra.mxu0 0
        %513 = vmatprep.subr.bf16.mxu0 0
        %514 = vmatpush1.bf16.msra.mxu0 0
        %515 = vmatprep.subr.bf16.mxu0 0
        %516 = vmatpush1.bf16.msra.mxu0 0
        %517 = vmatprep.subr.bf16.mxu0 0
        %518 = vmatpush1.bf16.msra.mxu0 0
        %519 = vmatprep.subr.bf16.mxu0 0
        %520 = vmatpush1.bf16.msra.mxu0 0
        %521 = vmatprep.mubr.bf16.mxu0 0
        %522 = vmatmul.mubr.bf16.gmra.mrb[0].mxu0 %v370
        %v523 = vpop.f32.mrb[0].mxu0
        %v524 = vadd.f32 0.0, %v523
        %v525 = vpop.f32.mrb[0].mxu0
        %v526 = vpop.f32.mrb[0].mxu0
        %v527 = vpop.f32.mrb[0].mxu0
        %528 = vdwg.mxu0
        %v529 = vpack.c.bf16 %v524, %v524
        %530 = vst.msk [vmem:[%s349] sm:$0xf] %vm413, %v529
        %s531 = sand.u32 %s142, 1
        %s532 = scalar_lea.sflag [#allocation4], %s531
        %s533 = sand.u32 %s142, 1
        %s534 = smul.addr %s533, 4
        %s535 = scalar_lea.vmem [#allocation10], %s534
        %s536 = sand.u32 %s29, 1
        %s537 = scalar_lea.sflag [#allocation12], %s536
        %s538 = sand.u32 %s170, 1
        %s539 = smul.addr %s538, 4
        %s540 = scalar_lea.vmem [#allocation11], %s539
        %s541 = sand.u32 %s29, 1
        %s542 = scalar_lea.sflag [#allocation12], %s541
        %s543 = sand.u32 %s198, 1
        %s544 = smul.addr %s543, 4
        %s545 = scalar_lea.vmem [#allocation13], %s544
        // Predicated region
        $region53: #{tpu_custom_call.1} parent=35 // pred_check
          %p546 = pneg %p152
        $region54: #{tpu_custom_call.1} parent=35 // pred_check_branch
          %548 = sbr.rel (%p546) target = $region56
        $region55: #{tpu_custom_call.1} parent=35 // pred_region
          %s550 = ssub.s32 64, 64
          %551 = vsyncadd %s532, %s550
          %s552 = sadd.s32 %s34, %s33
          %s553 = smul.addr %s552, 64
          %s554 = scalar_lea.hbm %s4, %s553
          %s556 = sshll.u32 %s535, 4
          %s557 = int_to_ptr.vmem [resolvable:$true] %s556
          %559 = dma.vmem_to_hbm [thread:$0]  %s557, 64, %s554, %s532
        $region56: #{tpu_custom_call.1} parent=35 // pred_fallthru
          _
        // Predicated region
        $region57: #{tpu_custom_call.1} parent=35 // pred_check
          %p560 = pneg %p180
        $region58: #{tpu_custom_call.1} parent=35 // pred_check_branch
          %562 = sbr.rel (%p560) target = $region60
        $region59: #{tpu_custom_call.1} parent=35 // pred_region
          %s564 = ssub.s32 64, 64
          %565 = vsyncadd %s537, %s564
          %s566 = sadd.s32 %s34, %s33
          %s567 = smul.addr %s566, 64
          %s568 = scalar_lea.hbm %s5, %s567
          %s570 = sshll.u32 %s540, 4
          %s571 = int_to_ptr.vmem [resolvable:$true] %s570
          %573 = dma.vmem_to_hbm [thread:$0]  %s571, 64, %s568, %s537
        $region60: #{tpu_custom_call.1} parent=35 // pred_fallthru
          _
        // Predicated region
        $region61: #{tpu_custom_call.1} parent=35 // pred_check
          %p574 = pneg %p208
        $region62: #{tpu_custom_call.1} parent=35 // pred_check_branch
          %576 = sbr.rel (%p574) target = $region64
        $region63: #{tpu_custom_call.1} parent=35 // pred_region
          %s578 = ssub.s32 64, 64
          %579 = vsyncadd %s542, %s578
          %s580 = sadd.s32 %s34, %s33
          %s581 = smul.addr %s580, 64
          %s582 = scalar_lea.hbm %s6, %s581
          %s584 = sshll.u32 %s545, 4
          %s585 = int_to_ptr.vmem [resolvable:$true] %s584
          %587 = dma.vmem_to_hbm [thread:$0]  %s585, 64, %s582, %s542
        $region64: #{tpu_custom_call.1} parent=35 // pred_fallthru
          _
      $region36: #{tpu_custom_call.1} parent=5 // pred_fallthru
        _
      %p588 = scmp.le.s32.totalorder 2, %s24
      // Predicated region
      $region65: #{tpu_custom_call.1} parent=5 // pred_check
        %p589 = pneg %p588
      $region66: #{tpu_custom_call.1} parent=5 // pred_check_branch
        %591 = sbr.rel (%p589) target = $region68
      $region67: #{tpu_custom_call.1} parent=5 // pred_region
        %s592 = ssub.s32 %s24, 2
        // Predicated region
        $region69: #{tpu_custom_call.1} parent=67 // pred_check
          %p593 = pneg %p158
        $region70: #{tpu_custom_call.1} parent=67 // pred_check_branch
          %595 = sbr.rel (%p593) target = $region72
        $region71: #{tpu_custom_call.1} parent=67 // pred_region
          %s596 = sand.u32 %s143, 1
          %s597 = scalar_lea.sflag [#allocation4], %s596
          %s598 = sand.u32 %s143, 1
          %s599 = smul.addr %s598, 4
          %s600 = scalar_lea.vmem [#allocation10], %s599
          %601 = dma.done %s597, 64
        $region72: #{tpu_custom_call.1} parent=67 // pred_fallthru
          _
        // Predicated region
        $region73: #{tpu_custom_call.1} parent=67 // pred_check
          %p602 = pneg %p186
        $region74: #{tpu_custom_call.1} parent=67 // pred_check_branch
          %604 = sbr.rel (%p602) target = $region76
        $region75: #{tpu_custom_call.1} parent=67 // pred_region
          %s605 = sand.u32 %s30, 1
          %s606 = scalar_lea.sflag [#allocation12], %s605
          %s607 = sand.u32 %s171, 1
          %s608 = smul.addr %s607, 4
          %s609 = scalar_lea.vmem [#allocation11], %s608
          %610 = dma.done %s606, 64
        $region76: #{tpu_custom_call.1} parent=67 // pred_fallthru
          _
        // Predicated region
        $region77: #{tpu_custom_call.1} parent=67 // pred_check
          %p611 = pneg %p214
        $region78: #{tpu_custom_call.1} parent=67 // pred_check_branch
          %613 = sbr.rel (%p611) target = $region80
        $region79: #{tpu_custom_call.1} parent=67 // pred_region
          %s614 = sand.u32 %s30, 1
          %s615 = scalar_lea.sflag [#allocation12], %s614
          %s616 = sand.u32 %s199, 1
          %s617 = smul.addr %s616, 4
          %s618 = scalar_lea.vmem [#allocation13], %s617
          %619 = dma.done %s615, 64
        $region80: #{tpu_custom_call.1} parent=67 // pred_fallthru
          _
      $region68: #{tpu_custom_call.1} parent=5 // pred_fallthru
        _
    $region6: #{tpu_custom_call.1} parent=1 // loop_footer
      %s28 = sadd.s32 1, %s24
    $region7: #{tpu_custom_call.1} parent=1 // loop_footer_branch
      %23 = sbr.rel target = $region3
    $region8: #{tpu_custom_call.1} parent=1 // loop_exit
      _
    %620 = vsyncpa [#allocation3], 1
    %s621 = scalar_lea.sflag [#allocation3], 1
    %622 = vsyncpa %s621, 1
    %623 = vsyncpa [#allocation6], 1
    %624 = vsyncpa [#allocation9], 1
    %625 = vsyncpa [#allocation4], 1
    %s626 = scalar_lea.sflag [#allocation4], 1
    %627 = vsyncpa %s626, 1
    %628 = vsyncpa [#allocation12], 1
    %s629 = scalar_lea.sflag [#allocation12], 1
    %630 = vsyncpa %s629, 1

</llo_original>
